<compile_context>
chip_gen: v7x
topology: tpu7x:2x2x1
jax: 0.10.0
libtpu: 0.0.40
codegen_flags: <defaults>
</compile_context>

<pallas_src>
import jax
import jax.numpy as jnp
from jax.experimental import pallas as pl
from jax.experimental.pallas import tpu as pltpu


def highway_kernel(x_ref, w_ref, b_ref, o_ref):
    d = o_ref.shape[-1]
    x = x_ref[...]                                            # (TM, D) f32

    # One fused matmul for both paths:  y = x @ [W1 | W2] + [b1 | b2]
    y = jnp.dot(x, w_ref[...], preferred_element_type=jnp.float32) + b_ref[...]

    # Transform path: H = relu(y[:, :D])
    h = jnp.maximum(y[:, :d], 0.0)

    # Gate path: T = sigmoid(y[:, D:]) via a single EUP tanh.
    t = 0.5 * (jnp.tanh(0.5 * y[:, d:]) + 1.0)

    # Gated residual:  y = H*T + x*(1-T)  ==  x + T*(H - x)
    o_ref[...] = (x + t * (h - x)).astype(o_ref.dtype)


def _round_up(v, m):
    return ((v + m - 1) // m) * m


def highway_forward(x, w1, b1, w2, b2):
    """Highway forward.

    x : (..., D) float32
    w1, w2 : (D, D) float32   (pre-transposed, i.e. (in_features, out_features))
    b1, b2 : (D,)   float32
    Returns (..., D) float32.
    """
    lead_shape = x.shape[:-1]
    d = x.shape[-1]
    assert w1.shape == (d, d) and w2.shape == (d, d), "Highway needs in==out"

    m = 1
    for s in lead_shape:
        m *= s
    x2d = x.reshape(m, d).astype(jnp.float32)

    # Fused weights/bias: (D, 2D) and (1, 2D).  No feature padding anywhere --
    # block dims that are not (8,128)-aligned equal the full array extent.
    w_cat = jnp.concatenate(
        [w1.astype(jnp.float32), w2.astype(jnp.float32)], axis=1)        # (D, 2D)
    b_cat = jnp.concatenate(
        [b1.astype(jnp.float32), b2.astype(jnp.float32)]).reshape(1, 2 * d)

    # --- row tile: multiple of 8, aim for >=8 grid steps, cap by VMEM budget.
    tm = min(1024, _round_up(pl.cdiv(m, 8), 8))
    budget = 24 * 1024 * 1024                       # leave headroom in 32 MiB scoped
    weight_bytes = (2 * d * d + 2 * d) * 4 * 2      # resident W/b (assume 2 buffers)
    per_row_bytes = d * 4 * 2 * 2                   # x + out tiles, double-buffered
    if weight_bytes < budget:
        cap = max(8, ((budget - weight_bytes) // per_row_bytes) // 8 * 8)
        tm = max(8, min(tm, cap))
    else:
        tm = 8

    grid = (pl.cdiv(m, tm),)

    cost = pl.CostEstimate(
        flops=2 * m * d * (2 * d),
        transcendentals=m * d,
        bytes_accessed=(2 * m * d + 2 * d * d + 2 * d) * 4,
    )

    out2d = pl.pallas_call(
        highway_kernel,
        out_shape=jax.ShapeDtypeStruct((m, d), jnp.float32),
        grid=grid,
        in_specs=[
            pl.BlockSpec((tm, d), lambda i: (i, 0)),        # x tile (streamed)
            pl.BlockSpec((d, 2 * d), lambda i: (0, 0)),     # [W1 | W2] (resident)
            pl.BlockSpec((1, 2 * d), lambda i: (0, 0)),     # [b1 | b2] (resident)
        ],
        out_specs=pl.BlockSpec((tm, d), lambda i: (i, 0)),
        compiler_params=pltpu.CompilerParams(
            dimension_semantics=("parallel",),
            vmem_limit_bytes=32 * 1024 * 1024,
        ),
        cost_estimate=cost,
    )(x2d, w_cat, b_cat)

    return out2d.reshape(*lead_shape, d)


if __name__ == "__main__":
    # Highway(input_size=64, output_size=64); input x of shape (B, T, 64).
    # (Highway's gated residual requires input_size == output_size.)
    d = 64
    B, T = 2, 8

    key = jax.random.PRNGKey(0)
    kx, kw1, kw2 = jax.random.split(key, 3)

    x = jax.random.normal(kx, (B, T, d), dtype=jnp.float32)

    # torch nn.Linear stores weight as (out, in); we keep it pre-transposed
    # as (in, out) for the kernel.  Bias init mirrors the module's __init__:
    # linear1.bias = 0, linear2.bias = -1.
    bound = 1.0 / (d ** 0.5)
    w1 = jax.random.uniform(kw1, (d, d), minval=-bound, maxval=bound,
                            dtype=jnp.float32)
    w2 = jax.random.uniform(kw2, (d, d), minval=-bound, maxval=bound,
                            dtype=jnp.float32)
    b1 = jnp.zeros((d,), jnp.float32)
    b2 = jnp.full((d,), -1.0, jnp.float32)

    out = highway_forward(x, w1, b1, w2, b2)
    out = jax.block_until_ready(out)

    assert out.shape == (B, T, d), out.shape
    assert out.dtype == jnp.float32

    # Pure-JAX reference check of the Highway math.
    h1 = jnp.maximum(jnp.einsum("btd,de->bte", x, w1) + b1, 0.0)
    h2 = jax.nn.sigmoid(jnp.einsum("btd,de->bte", x, w2) + b2)
    ref = h1 * h2 + x * (1.0 - h2)
    assert bool(jnp.all(jnp.isfinite(out)))
    assert bool(jnp.allclose(out, ref, atol=2e-5, rtol=2e-5)), \
        float(jnp.max(jnp.abs(out - ref)))

    print("KERNEL_OK")
</pallas_src>

<mosaic_0001>
module attributes {stable_mosaic.version = 11 : i64} {
  func.func @highway_kernel(%arg0: i32, %arg1: memref<8x64xf32, #tpu.memory_space<vmem>>, %arg2: memref<64x128xf32, #tpu.memory_space<vmem>>, %arg3: memref<1x128xf32, #tpu.memory_space<vmem>>, %arg4: memref<8x64xf32, #tpu.memory_space<vmem>>) attributes {dimension_semantics = [#tpu.dimension_semantics<parallel>], iteration_bounds = array<i64: 2>, scalar_prefetch = 0 : i64, scratch_operands = 0 : i64, tpu.core_type = #tpu.core_type<tc>, window_params = [{transform_indices = @transform_0, window_bounds = array<i64: 8, 64>}, {pipeline_mode = #tpu.pipeline_mode<synchronous>, transform_indices = @transform_1, window_bounds = array<i64: 64, 128>}, {pipeline_mode = #tpu.pipeline_mode<synchronous>, transform_indices = @transform_2, window_bounds = array<i64: 1, 128>}, {transform_indices = @transform_3, window_bounds = array<i64: 8, 64>}]} {
    %c0 = arith.constant 0 : index
    %c0_0 = arith.constant 0 : index
    %0 = vector.load %arg1[%c0, %c0_0] : memref<8x64xf32, #tpu.memory_space<vmem>>, vector<8x64xf32>
    %c0_1 = arith.constant 0 : index
    %c0_2 = arith.constant 0 : index
    %1 = vector.load %arg2[%c0_1, %c0_2] : memref<64x128xf32, #tpu.memory_space<vmem>>, vector<64x128xf32>
    %cst = arith.constant dense<0.000000e+00> : vector<8x128xf32>
    %2 = tpu.matmul %0, %1, %cst {dimension_numbers = #tpu.dot_dimension_numbers<[1], [0], [0], [1], [0, 0, 1, 1], [], []>} : vector<8x64xf32>, vector<64x128xf32>, vector<8x128xf32> -> vector<8x128xf32>
    %c0_3 = arith.constant 0 : index
    %c0_4 = arith.constant 0 : index
    %3 = vector.load %arg3[%c0_3, %c0_4] : memref<1x128xf32, #tpu.memory_space<vmem>>, vector<1x128xf32>
    %4 = vector.broadcast %3 : vector<1x128xf32> to vector<8x128xf32>
    %5 = arith.addf %2, %4 : vector<8x128xf32>
    %6 = vector.extract_strided_slice %5 {offsets = [0, 0], sizes = [8, 64], strides = [1, 1]} : vector<8x128xf32> to vector<8x64xf32>
    %cst_5 = arith.constant 0.000000e+00 : f32
    %7 = vector.broadcast %cst_5 : f32 to vector<8x64xf32>
    %8 = arith.maximumf %6, %7 : vector<8x64xf32>
    %9 = vector.extract_strided_slice %5 {offsets = [0, 64], sizes = [8, 64], strides = [1, 1]} : vector<8x128xf32> to vector<8x64xf32>
    %cst_6 = arith.constant 5.000000e-01 : f32
    %10 = vector.broadcast %cst_6 : f32 to vector<8x64xf32>
    %11 = arith.mulf %10, %9 : vector<8x64xf32>
    %12 = math.tanh %11 : vector<8x64xf32>
    %cst_7 = arith.constant 1.000000e+00 : f32
    %13 = vector.broadcast %cst_7 : f32 to vector<8x64xf32>
    %14 = arith.addf %12, %13 : vector<8x64xf32>
    %cst_8 = arith.constant 5.000000e-01 : f32
    %15 = vector.broadcast %cst_8 : f32 to vector<8x64xf32>
    %16 = arith.mulf %15, %14 : vector<8x64xf32>
    %17 = arith.subf %8, %0 : vector<8x64xf32>
    %18 = arith.mulf %16, %17 : vector<8x64xf32>
    %19 = arith.addf %0, %18 : vector<8x64xf32>
    %c0_9 = arith.constant 0 : index
    %c0_10 = arith.constant 0 : index
    %20 = vector.load %arg4[%c0_9, %c0_10] : memref<8x64xf32, #tpu.memory_space<vmem>>, vector<8x64xf32>
    tpu.vector_store %arg4[%c0_9, %c0_10], %19 {strides = array<i32>} : memref<8x64xf32, #tpu.memory_space<vmem>>, vector<8x64xf32>,
    return
  }
  func.func @transform_0(%arg0: i32) -> (i32, i32) {
    %c0_i32 = arith.constant 0 : i32
    %c0_i32_0 = arith.constant 0 : i32
    return %arg0, %c0_i32 : i32, i32
  }
  func.func @transform_1(%arg0: i32) -> (i32, i32) {
    %c0_i32 = arith.constant 0 : i32
    %c0_i32_0 = arith.constant 0 : i32
    %c0_i32_1 = arith.constant 0 : i32
    return %c0_i32, %c0_i32_0 : i32, i32
  }
  func.func @transform_2(%arg0: i32) -> (i32, i32) {
    %c0_i32 = arith.constant 0 : i32
    %c0_i32_0 = arith.constant 0 : i32
    %c0_i32_1 = arith.constant 0 : i32
    return %c0_i32, %c0_i32_0 : i32, i32
  }
  func.func @transform_3(%arg0: i32) -> (i32, i32) {
    %c0_i32 = arith.constant 0 : i32
    %c0_i32_0 = arith.constant 0 : i32
    return %arg0, %c0_i32 : i32, i32
  }
}

</mosaic_0001>

<llo_original>
// kernel: tpu_custom_call.1
$region0: #{tpu_custom_call.1}
  #allocation0 [shape = 'u32[]', space=smem, size = 0x4, offset = 0x4, fixed_abs, tag = 'smem constant byte address 0x4 - core index']
  #allocation1 [shape = 'u32[144,128]{1,0:T(1,128)}', space=vmem, size = 0x12000, scoped, tag = 'internal scratch']
  %s0 = inlined_call_operand.hbm [shape: f32[16,64], index: 0, kind: input, shape index: {}]
  %s1 = inlined_call_operand.hbm [shape: f32[64,128], index: 1, kind: input, shape index: {}]
  %s2 = inlined_call_operand.vmem [shape: f32[1,128], index: 2, kind: input, shape index: {}]
  %s3 = inlined_call_operand.hbm [shape: f32[16,64], index: 3, kind: output, shape index: {}]
  %s4 = sld [smem:[#allocation0]]
  $region53: #{tpu_custom_call.1} parent=0
    _
  %s6 = ssub.s32 1, %s4
  %s7 = scalar_select 0, %s6, %s4
  $region1: #{tpu_custom_call.1} parent=0
    #allocation2 [shape = 'u8[8192]{0}', space=vmem, size = 0x2000, scoped, tag = 'input window, operand 0']
    #allocation3 [shape = 's32[2]{0}', space=sflag, size = 0x8, scoped, tag = 'scoped memory for tpu_custom_call.1']
    #allocation4 [shape = 's32[2]{0}', space=sflag, size = 0x8, scoped, tag = 'scoped memory for tpu_custom_call.1']
    #allocation5 [shape = 'u8[32768]{0}', space=vmem, size = 0x8000, scoped, tag = 'input window, operand 1, single buffered']
    #allocation6 [shape = 's32[1]{0}', space=sflag, size = 0x4, scoped, tag = 'scoped memory for tpu_custom_call.1']
    #allocation7 [shape = 'u8[8192]{0}', space=vmem, size = 0x2000, scoped, tag = 'output window, operand 0']
    %8 = vsyncpa [#allocation3], 0
    %s9 = scalar_lea.sflag [#allocation3], 1
    %10 = vsyncpa %s9, 0
    %11 = vsyncpa [#allocation6], 0
    %12 = vsyncpa [#allocation4], 0
    %s13 = scalar_lea.sflag [#allocation4], 1
    %14 = vsyncpa %s13, 0
    loop: start=0, step=1, limit=4
    $region2: #{tpu_custom_call.1} parent=1 // loop_pre_header
      _
    $region3: #{tpu_custom_call.1} parent=1 // loop_header
      %s16 = sphi 0, %s20
      %p17 = scmp.ge.s32.totalorder %s16, 4
      %s26 = sphi 0, %s28
      %s29 = sphi 0, %s26
      %s30 = sphi 0, %s29
      %s46 = sphi 0, %s30
      %s50 = sphi 0, %s50
      %s52 = sphi 0, %s50
      %s53 = sphi 0, %s52
      %s67 = sphi 0, %s53
      %s71 = sphi 0, %s71
      %s73 = sphi 0, %s71
      %s74 = sphi 0, %s73
      %s88 = sphi 0, %s74
      %s94 = sphi 0, %s96
      %s97 = sphi 0, %s94
      %s98 = sphi 0, %s97
      %s114 = sphi 0, %s98
    $region4: #{tpu_custom_call.1} parent=1 // loop_header_branch
      %19 = sbr.rel (%p17) target = $region8
    $region5: #{tpu_custom_call.1} parent=1 // loop_body
      %s21 = ssub.s32 %s16, 1
      %s22 = ssub.s32 %s16, 2
      %s23 = sadd.s32 %s16, 1
      %s24 = ssub.s32 %s16, %s23
      %p25 = scmp.eq.s32.totalorder %s24, 0
      %s27 = sadd.s32 %s26, 1
      %s28 = scalar_select %p25, %s26, %s27
      %p31 = pneg %p25
      %p32 = scmp.eq.s32.totalorder %s16, 1
      %p33 = por %p31, %p32
      %p34 = scmp.ne.s32.totalorder %s26, %s29
      %p35 = scmp.eq.s32.totalorder %s16, 0
      %p36 = por %p34, %p35
      %p37 = scmp.ne.s32.totalorder %s26, %s29
      %p38 = scmp.eq.s32.totalorder %s21, 1
      %p39 = por %p37, %p38
      %p40 = scmp.ne.s32.totalorder %s29, %s30
      %p41 = scmp.eq.s32.totalorder %s21, 0
      %p42 = por %p40, %p41
      %p43 = scmp.ne.s32.totalorder %s29, %s30
      %p44 = scmp.eq.s32.totalorder %s22, 1
      %p45 = por %p43, %p44
      %p47 = scmp.ne.s32.totalorder %s30, %s46
      %p48 = scmp.eq.s32.totalorder %s22, 0
      %p49 = por %p47, %p48
      %s51 = sadd.s32 %s50, 1
      %p54 = scmp.eq.s32.totalorder %s16, 1
      %p55 = scmp.ne.s32.totalorder %s50, %s52
      %p56 = scmp.eq.s32.totalorder %s16, 0
      %p57 = por %p55, %p56
      %p58 = scmp.ne.s32.totalorder %s50, %s52
      %p59 = scmp.eq.s32.totalorder %s21, 1
      %p60 = por %p58, %p59
      %p61 = scmp.ne.s32.totalorder %s52, %s53
      %p62 = scmp.eq.s32.totalorder %s21, 0
      %p63 = por %p61, %p62
      %p64 = scmp.ne.s32.totalorder %s52, %s53
      %p65 = scmp.eq.s32.totalorder %s22, 1
      %p66 = por %p64, %p65
      %p68 = scmp.ne.s32.totalorder %s53, %s67
      %p69 = scmp.eq.s32.totalorder %s22, 0
      %p70 = por %p68, %p69
      %s72 = sadd.s32 %s71, 1
      %p75 = scmp.eq.s32.totalorder %s16, 1
      %p76 = scmp.ne.s32.totalorder %s71, %s73
      %p77 = scmp.eq.s32.totalorder %s16, 0
      %p78 = por %p76, %p77
      %p79 = scmp.ne.s32.totalorder %s71, %s73
      %p80 = scmp.eq.s32.totalorder %s21, 1
      %p81 = por %p79, %p80
      %p82 = scmp.ne.s32.totalorder %s73, %s74
      %p83 = scmp.eq.s32.totalorder %s21, 0
      %p84 = por %p82, %p83
      %p85 = scmp.ne.s32.totalorder %s73, %s74
      %p86 = scmp.eq.s32.totalorder %s22, 1
      %p87 = por %p85, %p86
      %p89 = scmp.ne.s32.totalorder %s74, %s88
      %p90 = scmp.eq.s32.totalorder %s22, 0
      %p91 = por %p89, %p90
      %s92 = ssub.s32 %s16, %s23
      %p93 = scmp.eq.s32.totalorder %s92, 0
      %s95 = sadd.s32 %s94, 1
      %s96 = scalar_select %p93, %s94, %s95
      %p99 = pneg %p93
      %p100 = scmp.eq.s32.totalorder %s16, 1
      %p101 = por %p99, %p100
      %p102 = scmp.ne.s32.totalorder %s94, %s97
      %p103 = scmp.eq.s32.totalorder %s16, 0
      %p104 = por %p102, %p103
      %p105 = scmp.ne.s32.totalorder %s94, %s97
      %p106 = scmp.eq.s32.totalorder %s21, 1
      %p107 = por %p105, %p106
      %p108 = scmp.ne.s32.totalorder %s97, %s98
      %p109 = scmp.eq.s32.totalorder %s21, 0
      %p110 = por %p108, %p109
      %p111 = scmp.ne.s32.totalorder %s97, %s98
      %p112 = scmp.eq.s32.totalorder %s22, 1
      %p113 = por %p111, %p112
      %p115 = scmp.ne.s32.totalorder %s98, %s114
      %p116 = scmp.eq.s32.totalorder %s22, 0
      %p117 = por %p115, %p116
      %p118 = scmp.le.s32.totalorder 1, %s16
      %p119 = scmp.lt.s32.totalorder %s16, 3
      %p120 = pnand %p118, %p119
      %p121 = pneg %p120
      // Predicated region
      $region9: #{tpu_custom_call.1} parent=5 // pred_check
        _
      $region10: #{tpu_custom_call.1} parent=5 // pred_check_branch
        %123 = sbr.rel (%p120) target = $region12
      $region11: #{tpu_custom_call.1} parent=5 // pred_region
        %s124 = ssub.s32 %s16, 1
        // Predicated region
        $region13: #{tpu_custom_call.1} parent=11 // pred_check
          %p125 = pneg %p63
        $region14: #{tpu_custom_call.1} parent=11 // pred_check_branch
          %127 = sbr.rel (%p125) target = $region16
        $region15: #{tpu_custom_call.1} parent=11 // pred_region
          %s129 = ssub.s32 1024, 1024
          %130 = vsyncadd [#allocation6], %s129
          %s131 = sshll.u32 [#allocation5], 4
          %s132 = int_to_ptr.vmem [resolvable:$true] %s131
          %137 = dma.hbm_to_vmem [thread:$0]  %s1, 1024, %s132, [#allocation6], 128, 128, 8
        $region16: #{tpu_custom_call.1} parent=11 // pred_fallthru
          _
        // Predicated region
        $region17: #{tpu_custom_call.1} parent=11 // pred_check
          %p138 = pneg %p84
        $region18: #{tpu_custom_call.1} parent=11 // pred_check_branch
          %140 = sbr.rel (%p138) target = $region20
        $region19: #{tpu_custom_call.1} parent=11 // pred_region
          _
        $region20: #{tpu_custom_call.1} parent=11 // pred_fallthru
          _
      $region12: #{tpu_custom_call.1} parent=5 // pred_fallthru
        _
      %p141 = scmp.lt.s32.totalorder %s16, 2
      // Predicated region
      $region21: #{tpu_custom_call.1} parent=5 // pred_check
        %p142 = pneg %p141
      $region22: #{tpu_custom_call.1} parent=5 // pred_check_branch
        %144 = sbr.rel (%p142) target = $region24
      $region23: #{tpu_custom_call.1} parent=5 // pred_region
        // Predicated region
        $region25: #{tpu_custom_call.1} parent=23 // pred_check
          %p145 = pneg %p36
        $region26: #{tpu_custom_call.1} parent=23 // pred_check_branch
          %147 = sbr.rel (%p145) target = $region28
        $region27: #{tpu_custom_call.1} parent=23 // pred_region
          %s148 = sand.u32 %s26, 1
          %s149 = scalar_lea.sflag [#allocation3], %s148
          %s150 = sand.u32 %s26, 1
          %s151 = smul.addr %s150, 8
          %s152 = scalar_lea.vmem [#allocation2], %s151
          %s154 = ssub.s32 128, 128
          %155 = vsyncadd %s149, %s154
          %s156 = smul.addr %s16, 128
          %s157 = scalar_lea.hbm %s0, %s156
          %s159 = sshll.u32 %s152, 4
          %s160 = int_to_ptr.vmem [resolvable:$true] %s159
          %162 = dma.hbm_to_vmem [thread:$0]  %s157, 128, %s160, %s149
        $region28: #{tpu_custom_call.1} parent=23 // pred_fallthru
          _
      $region24: #{tpu_custom_call.1} parent=5 // pred_fallthru
        _
      %p163 = scmp.le.s32.totalorder 1, %s16
      %p164 = scmp.lt.s32.totalorder %s16, 3
      %p165 = pnand %p163, %p164
      %p166 = pneg %p165
      // Predicated region
      $region29: #{tpu_custom_call.1} parent=5 // pred_check
        _
      $region30: #{tpu_custom_call.1} parent=5 // pred_check_branch
        %168 = sbr.rel (%p165) target = $region32
      $region31: #{tpu_custom_call.1} parent=5 // pred_region
        %s169 = ssub.s32 %s16, 1
        %s170 = sand.u32 %s29, 1
        %s171 = scalar_lea.sflag [#allocation3], %s170
        %s172 = sand.u32 %s29, 1
        %s173 = smul.addr %s172, 8
        %s174 = scalar_lea.vmem [#allocation2], %s173
        // Predicated region
        $region33: #{tpu_custom_call.1} parent=31 // pred_check
          %p175 = pneg %p42
        $region34: #{tpu_custom_call.1} parent=31 // pred_check_branch
          %177 = sbr.rel (%p175) target = $region36
        $region35: #{tpu_custom_call.1} parent=31 // pred_region
          %178 = dma.done %s171, 128
        $region36: #{tpu_custom_call.1} parent=31 // pred_fallthru
          _
        // Predicated region
        $region37: #{tpu_custom_call.1} parent=31 // pred_check
          %p179 = pneg %p63
        $region38: #{tpu_custom_call.1} parent=31 // pred_check_branch
          %181 = sbr.rel (%p179) target = $region40
        $region39: #{tpu_custom_call.1} parent=31 // pred_region
          %182 = dma.done [#allocation6], 1024
        $region40: #{tpu_custom_call.1} parent=31 // pred_fallthru
          _
        %s183 = sand.u32 %s29, 1
        %s184 = scalar_lea.sflag [#allocation3], %s183
        %s185 = sand.u32 %s29, 1
        %s186 = smul.addr %s185, 8
        %s187 = scalar_lea.vmem [#allocation2], %s186
        %p188 = pneg %p42
        %p189 = pneg %p39
        %p190 = pneg %p63
        %p191 = pneg %p60
        %p192 = pneg %p84
        %p193 = pneg %p81
        %p194 = pneg %p110
        %p195 = pneg %p107
        %s196 = sand.u32 %s97, 1
        %s197 = scalar_lea.sflag [#allocation4], %s196
        %s198 = sand.u32 %s97, 1
        %s199 = smul.addr %s198, 8
        %s200 = scalar_lea.vmem [#allocation7], %s199
        %v201 = vld [vmem:[%s174] sm:$0xff]
        %v202 = vld [vmem:[#allocation5] sm:$0xff]
        %v203 = vld [vmem:[#allocation5 + $0x8] sm:$0xff]
        %v204 = vld [vmem:[#allocation5 + $0x10] sm:$0xff]
        %v205 = vld [vmem:[#allocation5 + $0x18] sm:$0xff]
        %v206 = vld [vmem:[#allocation5 + $0x20] sm:$0xff]
        %v207 = vld [vmem:[#allocation5 + $0x28] sm:$0xff]
        %v208 = vld [vmem:[#allocation5 + $0x30] sm:$0xff]
        %v209 = vld [vmem:[#allocation5 + $0x38] sm:$0xff]
        %v210 = vld [vmem:[%s2] sm:$0x1]
        %v212 = vlaneseq
        %v213 = vshrl.u32 %v212, 7
        %v214 = vsub.s32 0, %v213
        %v215 = vrot.slane %v210, %v214
        %vm217 = vcmask 523264
        %v219 = vsel %vm217, %v201, 0
        %221 = vmatprep.subr.mxu0 0.0
        %222 = vmatpush1.msra.mxu0 %v202
        %223 = vmatprep.subr.mxu0 0.0
        %224 = vmatpush1.msra.mxu0 %v203
        %225 = vmatprep.subr.mxu0 0.0
        %226 = vmatpush1.msra.mxu0 %v204
        %227 = vmatprep.subr.mxu0 0.0
        %228 = vmatpush1.msra.mxu0 %v205
        %229 = vmatprep.subr.mxu0 0.0
        %230 = vmatpush1.msra.mxu0 %v206
        %231 = vmatprep.subr.mxu0 0.0
        %232 = vmatpush1.msra.mxu0 %v207
        %233 = vmatprep.subr.mxu0 0.0
        %234 = vmatpush1.msra.mxu0 %v208
        %235 = vmatprep.subr.mxu0 0.0
        %236 = vmatpush1.msra.mxu0 %v209
        %237 = vmatprep.subr.mxu0 0.0
        %238 = vmatpush1.msra.mxu0 0.0
        %239 = vmatprep.subr.mxu0 0.0
        %240 = vmatpush1.msra.mxu0 0.0
        %241 = vmatprep.subr.mxu0 0.0
        %242 = vmatpush1.msra.mxu0 0.0
        %243 = vmatprep.subr.mxu0 0.0
        %244 = vmatpush1.msra.mxu0 0.0
        %245 = vmatprep.subr.mxu0 0.0
        %246 = vmatpush1.msra.mxu0 0.0
        %247 = vmatprep.subr.mxu0 0.0
        %248 = vmatpush1.msra.mxu0 0.0
        %249 = vmatprep.subr.mxu0 0.0
        %250 = vmatpush1.msra.mxu0 0.0
        %251 = vmatprep.subr.mxu0 0.0
        %252 = vmatpush1.msra.mxu0 0.0
        %253 = vmatprep.subr.mxu0 0.0
        %254 = vmatpush1.msra.mxu0 0.0
        %255 = vmatprep.subr.mxu0 0.0
        %256 = vmatpush1.msra.mxu0 0.0
        %257 = vmatprep.subr.mxu0 0.0
        %258 = vmatpush1.msra.mxu0 0.0
        %259 = vmatprep.subr.mxu0 0.0
        %260 = vmatpush1.msra.mxu0 0.0
        %261 = vmatprep.subr.mxu0 0.0
        %262 = vmatpush1.msra.mxu0 0.0
        %263 = vmatprep.subr.mxu0 0.0
        %264 = vmatpush1.msra.mxu0 0.0
        %265 = vmatprep.subr.mxu0 0.0
        %266 = vmatpush1.msra.mxu0 0.0
        %267 = vmatprep.subr.mxu0 0.0
        %268 = vmatpush1.msra.mxu0 0.0
        %269 = vmatprep.subr.mxu0 0.0
        %270 = vmatpush1.msra.mxu0 0.0
        %271 = vmatprep.subr.mxu0 0.0
        %272 = vmatpush1.msra.mxu0 0.0
        %273 = vmatprep.subr.mxu0 0.0
        %274 = vmatpush1.msra.mxu0 0.0
        %275 = vmatprep.subr.mxu0 0.0
        %276 = vmatpush1.msra.mxu0 0.0
        %277 = vmatprep.subr.mxu0 0.0
        %278 = vmatpush1.msra.mxu0 0.0
        %279 = vmatprep.subr.mxu0 0.0
        %280 = vmatpush1.msra.mxu0 0.0
        %281 = vmatprep.subr.mxu0 0.0
        %282 = vmatpush1.msra.mxu0 0.0
        %283 = vmatprep.subr.mxu0 0.0
        %284 = vmatpush1.msra.mxu0 0.0
        %285 = vmatprep.mubr.f32.mxu0 0.0
        %286 = vmatmul.mubr.f32.gmra.mrb[0].mxu0 %v219
        %v287 = vpop.f32.mrb[0].mxu0
        %v288 = vadd.f32 %v215, %v287
        %v289 = vpop.f32.mrb[0].mxu0
        %290 = vdwg.mxu0
        %v291 = vmax.f32 %v288, 0.0
        %v292 = vmul.f32 %v288, 0.5
        %v293 = vtanh.pop %v292
        %v294 = vadd.f32 %v293, 1.0
        %v295 = vmul.f32 %v294, 0.5
        %v296 = vsub.f32 %v291, %v201
        %298 = vrot.lane.b32.xlu0 %v296, 64
        %v299 = vpop.permute.xlu0 %298
        %v301 = vmul.f32 %v295, %v299
        %303 = vrot.lane.b32.xlu0 %v301, 64
        %v304 = vpop.permute.xlu0 %303
        %v306 = vadd.f32 %v201, %v304
        %307 = vst.msk [vmem:[%s200] sm:$0xff] %vm217, %v306
        %s308 = sand.u32 %s97, 1
        %s309 = scalar_lea.sflag [#allocation4], %s308
        %s310 = sand.u32 %s97, 1
        %s311 = smul.addr %s310, 8
        %s312 = scalar_lea.vmem [#allocation7], %s311
        // Predicated region
        $region41: #{tpu_custom_call.1} parent=31 // pred_check
          %p313 = pneg %p107
        $region42: #{tpu_custom_call.1} parent=31 // pred_check_branch
          %315 = sbr.rel (%p313) target = $region44
        $region43: #{tpu_custom_call.1} parent=31 // pred_region
          %s317 = ssub.s32 128, 128
          %318 = vsyncadd %s309, %s317
          %s319 = smul.addr %s21, 128
          %s320 = scalar_lea.hbm %s3, %s319
          %s322 = sshll.u32 %s312, 4
          %s323 = int_to_ptr.vmem [resolvable:$true] %s322
          %325 = dma.vmem_to_hbm [thread:$0]  %s323, 128, %s320, %s309
        $region44: #{tpu_custom_call.1} parent=31 // pred_fallthru
          _
      $region32: #{tpu_custom_call.1} parent=5 // pred_fallthru
        _
      %p326 = scmp.le.s32.totalorder 2, %s16
      // Predicated region
      $region45: #{tpu_custom_call.1} parent=5 // pred_check
        %p327 = pneg %p326
      $region46: #{tpu_custom_call.1} parent=5 // pred_check_branch
        %329 = sbr.rel (%p327) target = $region48
      $region47: #{tpu_custom_call.1} parent=5 // pred_region
        %s330 = ssub.s32 %s16, 2
        // Predicated region
        $region49: #{tpu_custom_call.1} parent=47 // pred_check
          %p331 = pneg %p113
        $region50: #{tpu_custom_call.1} parent=47 // pred_check_branch
          %333 = sbr.rel (%p331) target = $region52
        $region51: #{tpu_custom_call.1} parent=47 // pred_region
          %s334 = sand.u32 %s98, 1
          %s335 = scalar_lea.sflag [#allocation4], %s334
          %s336 = sand.u32 %s98, 1
          %s337 = smul.addr %s336, 8
          %s338 = scalar_lea.vmem [#allocation7], %s337
          %339 = dma.done %s335, 128
        $region52: #{tpu_custom_call.1} parent=47 // pred_fallthru
          _
      $region48: #{tpu_custom_call.1} parent=5 // pred_fallthru
        _
    $region6: #{tpu_custom_call.1} parent=1 // loop_footer
      %s20 = sadd.s32 1, %s16
    $region7: #{tpu_custom_call.1} parent=1 // loop_footer_branch
      %15 = sbr.rel target = $region3
    $region8: #{tpu_custom_call.1} parent=1 // loop_exit
      _
    %340 = vsyncpa [#allocation3], 1
    %s341 = scalar_lea.sflag [#allocation3], 1
    %342 = vsyncpa %s341, 1
    %343 = vsyncpa [#allocation6], 1
    %344 = vsyncpa [#allocation4], 1
    %s345 = scalar_lea.sflag [#allocation4], 1
    %346 = vsyncpa %s345, 1

</llo_original>
